<compile_context>
chip_gen: v7x
topology: tpu7x:2x2x1
jax: 0.10.0
libtpu: 0.0.40
codegen_flags: <defaults>
</compile_context>

<pallas_src>
import math
from functools import partial

import jax
import jax.numpy as jnp
from jax.experimental import pallas as pl
from jax.experimental.pallas import tpu as pltpu

_INV_SQRT2 = 1.0 / math.sqrt(2.0)


def _round_up(x, m):
    return ((x + m - 1) // m) * m


def _sublane_multiple(dtype):
    # rows per sublane tile: 8 for 4-byte, 16 for 2-byte, 32 for 1-byte dtypes
    return {4: 8, 2: 16, 1: 32}.get(jnp.dtype(dtype).itemsize, 8)


def _device_kind():
    try:
        return jax.devices()[0].device_kind.lower()
    except Exception:
        return ""


def _vmem_capacity_bytes():
    try:
        return int(pltpu.get_tpu_info().vmem_capacity_bytes)
    except Exception:
        # v7x-class parts have 64 MiB / TensorCore, older parts 128 MiB.
        return (64 << 20) if "v7" in _device_kind() else (128 << 20)


def _gelu(h):
    # Exact (erf-based) GELU -- matches torch.nn.GELU() default.
    return 0.5 * h * (1.0 + jax.lax.erf(h * _INV_SQRT2))


# --------------------------------------------------------------------------
# Kernel 1: whole fc1/fc2 weights resident in VMEM, 1-D grid over row tiles.
# --------------------------------------------------------------------------
def _mlp_kernel_resident(x_ref, w1_ref, b1_ref, w2_ref, b2_ref, o_ref,
                         *, n_sub, epi_dtype):
    tm = x_ref.shape[0]
    sub = tm // n_sub
    w1 = w1_ref[...]
    w2 = w2_ref[...]
    b1 = b1_ref[...].astype(jnp.float32)
    b2 = b2_ref[...].astype(jnp.float32)
    # Independent sub-tile chains: fc1 (MXU) of chain s+1 can be interleaved
    # by the scheduler with the bias+GELU (VALU/EUP) + fc2 of chain s.
    for s in range(n_sub):
        rows = pl.ds(s * sub, sub)
        h = jnp.dot(x_ref[rows, :], w1, preferred_element_type=jnp.float32)
        h = (h + b1).astype(epi_dtype)
        h = _gelu(h)
        y = jnp.dot(h.astype(w2.dtype), w2, preferred_element_type=jnp.float32)
        o_ref[rows, :] = (y + b2).astype(o_ref.dtype)


# --------------------------------------------------------------------------
# Kernel 2: hidden-dim streaming (2-D grid: rows x hidden chunks) with an
# f32 fc2 accumulator -- used when resident weights would not fit VMEM.
# --------------------------------------------------------------------------
def _mlp_kernel_ktiled(x_ref, w1_ref, b1_ref, w2_ref, b2_ref, o_ref, acc_ref,
                       *, n_sub, epi_dtype):
    k = pl.program_id(1)

    @pl.when(k == 0)
    def _init():
        acc_ref[...] = jnp.zeros_like(acc_ref)

    tm = x_ref.shape[0]
    sub = tm // n_sub
    w1 = w1_ref[...]
    w2 = w2_ref[...]
    b1 = b1_ref[...].astype(jnp.float32)
    for s in range(n_sub):
        rows = pl.ds(s * sub, sub)
        h = jnp.dot(x_ref[rows, :], w1, preferred_element_type=jnp.float32)
        h = (h + b1).astype(epi_dtype)
        h = _gelu(h)
        acc_ref[rows, :] += jnp.dot(h.astype(w2.dtype), w2,
                                    preferred_element_type=jnp.float32)

    @pl.when(k == pl.num_programs(1) - 1)
    def _finish():
        o_ref[...] = (acc_ref[...]
                      + b2_ref[...].astype(jnp.float32)).astype(o_ref.dtype)


def mlp_pallas(x, w1, b1, w2, b2, *, tm=None, tk=None):
    """x: (B, N, C_in); w1: (C_in, C_hid); b1: (C_hid,); w2: (C_hid, C_out); b2: (C_out,)."""
    B, N, C_in = x.shape
    C_hid = w1.shape[1]
    C_out = w2.shape[1]
    M = B * N

    x_bytes = jnp.dtype(x.dtype).itemsize
    w1b = jnp.dtype(w1.dtype).itemsize
    w2b = jnp.dtype(w2.dtype).itemsize
    sub_m = _sublane_multiple(x.dtype)

    kind = _device_kind()
    is_v5e = ("v5 lite" in kind) or ("v5e" in kind)
    vmem_cap = _vmem_capacity_bytes()
    small_vmem = vmem_cap <= (64 << 20)          # v7x-class per-TC VMEM
    vmem_budget = int(vmem_cap * 0.80)           # leave headroom for Mosaic

    # ---- lane-dense output channels (avoid masked vst on ragged C_out) -----
    C_out_p = _round_up(C_out, 128)
    if C_out_p != C_out:
        w2 = jnp.pad(w2, ((0, 0), (0, C_out_p - C_out)))
        b2 = jnp.pad(b2, (0, C_out_p - C_out))

    # ---- VMEM footprint models ----------------------------------------------
    def resident_bytes(t):
        weights = (C_in * C_hid + C_hid) * w1b + (C_hid * C_out_p + C_out_p) * w2b
        tiles = 2 * t * C_in * x_bytes + 2 * t * C_out_p * x_bytes
        inter = t * C_hid * 4 + t * C_hid * w2b + t * C_out_p * 4
        return weights + tiles + inter

    def ktiled_bytes(t, k):
        tiles = 2 * t * C_in * x_bytes + 2 * t * C_out_p * x_bytes
        weights = 2 * ((C_in * k + k) * w1b + k * C_out_p * w2b) + C_out_p * w2b
        inter = t * k * 4 + t * k * w2b + 2 * t * C_out_p * 4   # h, cast h, acc+y
        return tiles + weights + inter

    # ---- row-tile selection ------------------------------------------------
    cap = 256 if small_vmem else 512
    if tm is None:
        if M <= cap:
            tm = max(sub_m, _round_up(M, sub_m))
        else:
            tm = 0
            t = cap
            while t >= 128:
                if M % t == 0:          # divides M: no HBM pad/slice of x/out
                    tm = t
                    break
                t -= sub_m
            if tm == 0:
                tm = cap
        if small_vmem:
            # megacore (2 TCs) wants >= 2 steps per core plus pipeline depth
            while tm > 128 and pl.cdiv(M, tm) < 4:
                tm = max(128, _round_up(tm // 2, sub_m))
    assert tm % sub_m == 0, "row tile must be a multiple of the sublane pack"

    # ---- path selection (resident weights vs hidden-dim streaming) ---------
    use_ktiled = tk is not None
    if not use_ktiled and resident_bytes(tm) > vmem_budget:
        t = tm
        while t > sub_m and resident_bytes(t) > vmem_budget:
            t = max(sub_m, _round_up(t // 2, sub_m))
        if resident_bytes(t) <= vmem_budget:
            tm = t
        elif C_hid % 128 == 0:
            use_ktiled = True
        else:
            tm = t  # best effort; compiler may still spill
    if use_ktiled and tk is None:
        divs = [d for d in range(128, C_hid + 1, 128) if C_hid % d == 0]
        tk = next((d for d in sorted(divs, reverse=True)
                   if ktiled_bytes(tm, d) <= vmem_budget), divs[0])
    if use_ktiled:
        assert C_hid % tk == 0 and tk % 128 == 0, \
            "hidden tile must divide C_hid and be lane-aligned"

    grid_m = pl.cdiv(M, tm)
    M_pad = grid_m * tm

    x2d = x.reshape(M, C_in)
    if M_pad != M:
        # TODO(synk): a masked tail store would avoid this extra HBM pass;
        # tile selection above prefers tm | M so this path is rare.
        x2d = jnp.pad(x2d, ((0, M_pad - M), (0, 0)))
    b1_2d = b1.reshape(1, C_hid)
    b2_2d = b2.reshape(1, C_out_p)

    # sub-tile interleaving factor
    if tm >= 512 and tm % (4 * sub_m) == 0:
        n_sub = 4
    elif tm >= 128 and tm % (2 * sub_m) == 0:
        n_sub = 2
    else:
        n_sub = 1

    # bf16 bias+GELU epilogue only where the VPU is bf16-native (v6e/v7x) and
    # the weights are already bf16; otherwise exact f32 (bit-parity with torch).
    epi_dtype = (jnp.bfloat16
                 if (jnp.dtype(w2.dtype) == jnp.dtype(jnp.bfloat16) and not is_v5e)
                 else jnp.float32)

    est = ktiled_bytes(tm, tk) if use_ktiled else resident_bytes(tm)
    vmem_limit = int(min(max(int(est * 1.25) + (2 << 20), 16 << 20),
                         int(vmem_cap * 0.85)))

    cost = pl.CostEstimate(
        flops=2 * M_pad * (C_in * C_hid + C_hid * C_out_p),
        transcendentals=M_pad * C_hid,
        bytes_accessed=(M_pad * C_in * x_bytes
                        + (C_in * C_hid + C_hid) * w1b
                        + (C_hid * C_out_p + C_out_p) * w2b
                        + M_pad * C_out_p * x_bytes),
    )

    if not use_ktiled:
        kernel = partial(_mlp_kernel_resident, n_sub=n_sub, epi_dtype=epi_dtype)
        out2d = pl.pallas_call(
            kernel,
            out_shape=jax.ShapeDtypeStruct((M_pad, C_out_p), x.dtype),
            grid_spec=pltpu.PrefetchScalarGridSpec(
                num_scalar_prefetch=0,
                grid=(grid_m,),
                in_specs=[
                    pl.BlockSpec((tm, C_in), lambda i: (i, 0)),         # x tile
                    pl.BlockSpec((C_in, C_hid), lambda i: (0, 0),
                                 pipeline_mode=pl.Buffered(1)),         # fc1 W
                    pl.BlockSpec((1, C_hid), lambda i: (0, 0),
                                 pipeline_mode=pl.Buffered(1)),         # fc1 b
                    pl.BlockSpec((C_hid, C_out_p), lambda i: (0, 0),
                                 pipeline_mode=pl.Buffered(1)),         # fc2 W
                    pl.BlockSpec((1, C_out_p), lambda i: (0, 0),
                                 pipeline_mode=pl.Buffered(1)),         # fc2 b
                ],
                out_specs=pl.BlockSpec((tm, C_out_p), lambda i: (i, 0)),
            ),
            compiler_params=pltpu.CompilerParams(
                dimension_semantics=("parallel",),
                vmem_limit_bytes=vmem_limit),
            cost_estimate=cost,
        )(x2d, w1, b1_2d, w2, b2_2d)
    else:
        grid_k = C_hid // tk
        kernel = partial(_mlp_kernel_ktiled, n_sub=n_sub, epi_dtype=epi_dtype)
        out2d = pl.pallas_call(
            kernel,
            out_shape=jax.ShapeDtypeStruct((M_pad, C_out_p), x.dtype),
            grid_spec=pltpu.PrefetchScalarGridSpec(
                num_scalar_prefetch=0,
                grid=(grid_m, grid_k),
                in_specs=[
                    pl.BlockSpec((tm, C_in), lambda i, k: (i, 0)),      # x tile
                    pl.BlockSpec((C_in, tk), lambda i, k: (0, k)),      # fc1 W chunk
                    pl.BlockSpec((1, tk), lambda i, k: (0, k)),         # fc1 b chunk
                    pl.BlockSpec((tk, C_out_p), lambda i, k: (k, 0)),   # fc2 W chunk
                    pl.BlockSpec((1, C_out_p), lambda i, k: (0, 0),
                                 pipeline_mode=pl.Buffered(1)),         # fc2 b
                ],
                out_specs=pl.BlockSpec((tm, C_out_p), lambda i, k: (i, 0)),
                scratch_shapes=[pltpu.VMEM((tm, C_out_p), jnp.float32)],
            ),
            compiler_params=pltpu.CompilerParams(
                dimension_semantics=("parallel", "arbitrary"),
                vmem_limit_bytes=vmem_limit),
            cost_estimate=cost,
        )(x2d, w1, b1_2d, w2, b2_2d)

    if M_pad != M or C_out_p != C_out:
        out2d = out2d[:M, :C_out]
    return out2d.reshape(B, N, C_out)


def mlp_reference(x, w1, b1, w2, b2):
    h = jnp.einsum("bnc,ch->bnh", x, w1,
                   precision=jax.lax.Precision.HIGHEST) + b1
    h = 0.5 * h * (1.0 + jax.lax.erf(h * _INV_SQRT2))
    return jnp.einsum("bnh,ho->bno", h, w2,
                      precision=jax.lax.Precision.HIGHEST) + b2


def _make_linear_params(key, cin, cout, dtype=jnp.float32):
    kw, kb = jax.random.split(key)
    lim = 1.0 / math.sqrt(cin)
    w = jax.random.uniform(kw, (cin, cout), dtype, -lim, lim)
    b = jax.random.uniform(kb, (cout,), dtype, -lim, lim)
    return w, b


if __name__ == "__main__":
    key = jax.random.PRNGKey(0)
    k_x1, k_x2, k_x3, k_fc1, k_fc2, k_fc1b, k_fc2b = jax.random.split(key, 7)

    # --- test 1: small dense shapes, resident-weight path --------------------
    B, N = 2, 8
    C_in, C_hid, C_out = 32, 64, 32
    x = jax.random.normal(k_x1, (B, N, C_in), dtype=jnp.float32)
    w1, b1 = _make_linear_params(k_fc1, C_in, C_hid)
    w2, b2 = _make_linear_params(k_fc2, C_hid, C_out)

    out = jax.block_until_ready(mlp_pallas(x, w1, b1, w2, b2))
    ref = mlp_reference(x, w1, b1, w2, b2)
    assert out.shape == (B, N, C_out)
    assert jnp.allclose(out, ref, atol=1e-4, rtol=1e-4), "mismatch vs reference"

    # --- test 2: ragged token count, exercises cdiv grid + tail padding ------
    x2 = jax.random.normal(k_x2, (1, 200, C_in), dtype=jnp.float32)
    out2 = jax.block_until_ready(mlp_pallas(x2, w1, b1, w2, b2, tm=64))
    ref2 = mlp_reference(x2, w1, b1, w2, b2)
    assert out2.shape == (1, 200, C_out)
    assert jnp.allclose(out2, ref2, atol=1e-4, rtol=1e-4), "ragged mismatch"

    # --- test 3: forced hidden-dim streaming path (tk) + sub-tile interleave --
    C_in3, C_hid3, C_out3 = 64, 256, 64
    x3 = jax.random.normal(k_x3, (2, 64, C_in3), dtype=jnp.float32)
    w1c, b1c = _make_linear_params(k_fc1b, C_in3, C_hid3)
    w2c, b2c = _make_linear_params(k_fc2b, C_hid3, C_out3)
    out3 = jax.block_until_ready(mlp_pallas(x3, w1c, b1c, w2c, b2c, tk=128))
    ref3 = mlp_reference(x3, w1c, b1c, w2c, b2c)
    assert out3.shape == (2, 64, C_out3)
    assert jnp.allclose(out3, ref3, atol=1e-4, rtol=1e-4), "k-tiled mismatch"

    print("KERNEL_OK")
</pallas_src>

<mosaic_0001>
module attributes {stable_mosaic.version = 11 : i64} {
  func.func @_mlp_kernel_resident(%arg0: i32, %arg1: memref<16x32xf32, #tpu.memory_space<vmem>>, %arg2: memref<32x64xf32, #tpu.memory_space<vmem>>, %arg3: memref<1x64xf32, #tpu.memory_space<vmem>>, %arg4: memref<64x128xf32, #tpu.memory_space<vmem>>, %arg5: memref<1x128xf32, #tpu.memory_space<vmem>>, %arg6: memref<16x128xf32, #tpu.memory_space<vmem>>) attributes {dimension_semantics = [#tpu.dimension_semantics<parallel>], iteration_bounds = array<i64: 1>, scalar_prefetch = 0 : i64, scratch_operands = 0 : i64, tpu.core_type = #tpu.core_type<tc>, window_params = [{transform_indices = @transform_0, window_bounds = array<i64: 16, 32>}, {pipeline_mode = #tpu.pipeline_mode<synchronous>, transform_indices = @transform_1, window_bounds = array<i64: 32, 64>}, {pipeline_mode = #tpu.pipeline_mode<synchronous>, transform_indices = @transform_2, window_bounds = array<i64: 1, 64>}, {pipeline_mode = #tpu.pipeline_mode<synchronous>, transform_indices = @transform_3, window_bounds = array<i64: 64, 128>}, {pipeline_mode = #tpu.pipeline_mode<synchronous>, transform_indices = @transform_4, window_bounds = array<i64: 1, 128>}, {transform_indices = @transform_5, window_bounds = array<i64: 16, 128>}]} {
    %c0 = arith.constant 0 : index
    %c0_0 = arith.constant 0 : index
    %0 = vector.load %arg2[%c0, %c0_0] : memref<32x64xf32, #tpu.memory_space<vmem>>, vector<32x64xf32>
    %c0_1 = arith.constant 0 : index
    %c0_2 = arith.constant 0 : index
    %1 = vector.load %arg4[%c0_1, %c0_2] : memref<64x128xf32, #tpu.memory_space<vmem>>, vector<64x128xf32>
    %c0_3 = arith.constant 0 : index
    %c0_4 = arith.constant 0 : index
    %2 = vector.load %arg3[%c0_3, %c0_4] : memref<1x64xf32, #tpu.memory_space<vmem>>, vector<1x64xf32>
    %c0_5 = arith.constant 0 : index
    %c0_6 = arith.constant 0 : index
    %3 = vector.load %arg5[%c0_5, %c0_6] : memref<1x128xf32, #tpu.memory_space<vmem>>, vector<1x128xf32>
    %c0_7 = arith.constant 0 : index
    %c0_8 = arith.constant 0 : index
    %4 = vector.load %arg1[%c0_7, %c0_8] : memref<16x32xf32, #tpu.memory_space<vmem>>, vector<16x32xf32>
    %cst = arith.constant dense<0.000000e+00> : vector<16x64xf32>
    %5 = tpu.matmul %4, %0, %cst {dimension_numbers = #tpu.dot_dimension_numbers<[1], [0], [0], [1], [0, 0, 1, 1], [], []>} : vector<16x32xf32>, vector<32x64xf32>, vector<16x64xf32> -> vector<16x64xf32>
    %6 = vector.broadcast %2 : vector<1x64xf32> to vector<16x64xf32>
    %7 = arith.addf %5, %6 : vector<16x64xf32>
    %cst_9 = arith.constant 5.000000e-01 : f32
    %8 = vector.broadcast %cst_9 : f32 to vector<16x64xf32>
    %9 = arith.mulf %8, %7 : vector<16x64xf32>
    %cst_10 = arith.constant 0.707106769 : f32
    %10 = vector.broadcast %cst_10 : f32 to vector<16x64xf32>
    %11 = arith.mulf %7, %10 : vector<16x64xf32>
    %12 = math.erf %11 : vector<16x64xf32>
    %cst_11 = arith.constant 1.000000e+00 : f32
    %13 = vector.broadcast %cst_11 : f32 to vector<16x64xf32>
    %14 = arith.addf %13, %12 : vector<16x64xf32>
    %15 = arith.mulf %9, %14 : vector<16x64xf32>
    %cst_12 = arith.constant dense<0.000000e+00> : vector<16x128xf32>
    %16 = tpu.matmul %15, %1, %cst_12 {dimension_numbers = #tpu.dot_dimension_numbers<[1], [0], [0], [1], [0, 0, 1, 1], [], []>} : vector<16x64xf32>, vector<64x128xf32>, vector<16x128xf32> -> vector<16x128xf32>
    %17 = vector.broadcast %3 : vector<1x128xf32> to vector<16x128xf32>
    %18 = arith.addf %16, %17 : vector<16x128xf32>
    %c0_13 = arith.constant 0 : index
    %c0_14 = arith.constant 0 : index
    %19 = vector.load %arg6[%c0_13, %c0_14] : memref<16x128xf32, #tpu.memory_space<vmem>>, vector<16x128xf32>
    tpu.vector_store %arg6[%c0_13, %c0_14], %18 {strides = array<i32>} : memref<16x128xf32, #tpu.memory_space<vmem>>, vector<16x128xf32>,
    return
  }
  func.func @transform_0(%arg0: i32) -> (i32, i32) {
    %c0_i32 = arith.constant 0 : i32
    %c0_i32_0 = arith.constant 0 : i32
    return %arg0, %c0_i32 : i32, i32
  }
  func.func @transform_1(%arg0: i32) -> (i32, i32) {
    %c0_i32 = arith.constant 0 : i32
    %c0_i32_0 = arith.constant 0 : i32
    %c0_i32_1 = arith.constant 0 : i32
    return %c0_i32, %c0_i32_0 : i32, i32
  }
  func.func @transform_2(%arg0: i32) -> (i32, i32) {
    %c0_i32 = arith.constant 0 : i32
    %c0_i32_0 = arith.constant 0 : i32
    %c0_i32_1 = arith.constant 0 : i32
    return %c0_i32, %c0_i32_0 : i32, i32
  }
  func.func @transform_3(%arg0: i32) -> (i32, i32) {
    %c0_i32 = arith.constant 0 : i32
    %c0_i32_0 = arith.constant 0 : i32
    %c0_i32_1 = arith.constant 0 : i32
    return %c0_i32, %c0_i32_0 : i32, i32
  }
  func.func @transform_4(%arg0: i32) -> (i32, i32) {
    %c0_i32 = arith.constant 0 : i32
    %c0_i32_0 = arith.constant 0 : i32
    %c0_i32_1 = arith.constant 0 : i32
    return %c0_i32, %c0_i32_0 : i32, i32
  }
  func.func @transform_5(%arg0: i32) -> (i32, i32) {
    %c0_i32 = arith.constant 0 : i32
    %c0_i32_0 = arith.constant 0 : i32
    return %arg0, %c0_i32 : i32, i32
  }
}

</mosaic_0001>

<llo_original>
// kernel: tpu_custom_call.1
$region0: #{tpu_custom_call.1}
  #allocation0 [shape = 'u32[]', space=smem, size = 0x4, offset = 0x4, fixed_abs, tag = 'smem constant byte address 0x4 - core index']
  #allocation1 [shape = 'u32[144,128]{1,0:T(1,128)}', space=vmem, size = 0x12000, scoped, tag = 'internal scratch']
  %s0 = inlined_call_operand.hbm [shape: f32[16,32], index: 0, kind: input, shape index: {}]
  %s1 = inlined_call_operand.hbm [shape: f32[32,64], index: 1, kind: input, shape index: {}]
  %s2 = inlined_call_operand.vmem [shape: f32[1,64], index: 2, kind: input, shape index: {}]
  %s3 = inlined_call_operand.hbm [shape: f32[64,128], index: 3, kind: input, shape index: {}]
  %s4 = inlined_call_operand.vmem [shape: f32[1,128], index: 4, kind: input, shape index: {}]
  %s5 = inlined_call_operand.hbm [shape: f32[16,128], index: 5, kind: output, shape index: {}]
  %s6 = sld [smem:[#allocation0]]
  $region42: #{tpu_custom_call.1} parent=0
    _
  %s8 = ssub.s32 1, %s6
  %s9 = scalar_select 0, %s8, %s6
  $region1: #{tpu_custom_call.1} parent=0
    #allocation2 [shape = 'u8[8192]{0}', space=vmem, size = 0x2000, scoped, tag = 'input window, operand 0, single buffered']
    #allocation3 [shape = 's32[1]{0}', space=sflag, size = 0x4, scoped, tag = 'scoped memory for tpu_custom_call.1']
    #allocation4 [shape = 's32[1]{0}', space=sflag, size = 0x4, scoped, tag = 'scoped memory for tpu_custom_call.1']
    #allocation5 [shape = 'u8[16384]{0}', space=vmem, size = 0x4000, scoped, tag = 'input window, operand 1, single buffered']
    #allocation6 [shape = 's32[1]{0}', space=sflag, size = 0x4, scoped, tag = 'scoped memory for tpu_custom_call.1']
    #allocation7 [shape = 'u8[32768]{0}', space=vmem, size = 0x8000, scoped, tag = 'input window, operand 3, single buffered']
    #allocation8 [shape = 'u8[8192]{0}', space=vmem, size = 0x2000, scoped, tag = 'output window, operand 0, single buffered']
    %10 = vsyncpa [#allocation3], 0
    %11 = vsyncpa [#allocation6], 0
    %12 = vsyncpa [#allocation4], 0
    // Predicated region
    $region2: #{tpu_custom_call.1} parent=1 // pred_check
      _
    $region3: #{tpu_custom_call.1} parent=1 // pred_check_branch
      %14 = sbr.rel (0) target = $region5
    $region4: #{tpu_custom_call.1} parent=1 // pred_region
      %s16 = ssub.s32 256, 256
      %17 = vsyncadd [#allocation3], %s16
      %s18 = sshll.u32 [#allocation2], 4
      %s19 = int_to_ptr.vmem [resolvable:$true] %s18
      %24 = dma.hbm_to_vmem [thread:$0]  %s0, 256, %s19, [#allocation3], 128, 128, 8
    $region5: #{tpu_custom_call.1} parent=1 // pred_fallthru
      _
    // Predicated region
    $region6: #{tpu_custom_call.1} parent=1 // pred_check
      _
    $region7: #{tpu_custom_call.1} parent=1 // pred_check_branch
      %26 = sbr.rel (0) target = $region9
    $region8: #{tpu_custom_call.1} parent=1 // pred_region
      %s28 = ssub.s32 512, 512
      %29 = vsyncadd [#allocation6], %s28
      %s30 = sshll.u32 [#allocation5], 4
      %s31 = int_to_ptr.vmem [resolvable:$true] %s30
      %36 = dma.hbm_to_vmem [thread:$0]  %s1, 512, %s31, [#allocation6], 128, 128, 8
    $region9: #{tpu_custom_call.1} parent=1 // pred_fallthru
      _
    // Predicated region
    $region10: #{tpu_custom_call.1} parent=1 // pred_check
      _
    $region11: #{tpu_custom_call.1} parent=1 // pred_check_branch
      %38 = sbr.rel (0) target = $region13
    $region12: #{tpu_custom_call.1} parent=1 // pred_region
      _
    $region13: #{tpu_custom_call.1} parent=1 // pred_fallthru
      _
    // Predicated region
    $region14: #{tpu_custom_call.1} parent=1 // pred_check
      _
    $region15: #{tpu_custom_call.1} parent=1 // pred_check_branch
      %40 = sbr.rel (0) target = $region17
    $region16: #{tpu_custom_call.1} parent=1 // pred_region
      %s42 = ssub.s32 1024, 1024
      %43 = vsyncadd [#allocation6], %s42
      %s44 = sshll.u32 [#allocation7], 4
      %s45 = int_to_ptr.vmem [resolvable:$true] %s44
      %50 = dma.hbm_to_vmem [thread:$0]  %s3, 1024, %s45, [#allocation6], 128, 128, 8
    $region17: #{tpu_custom_call.1} parent=1 // pred_fallthru
      _
    // Predicated region
    $region18: #{tpu_custom_call.1} parent=1 // pred_check
      _
    $region19: #{tpu_custom_call.1} parent=1 // pred_check_branch
      %52 = sbr.rel (0) target = $region21
    $region20: #{tpu_custom_call.1} parent=1 // pred_region
      _
    $region21: #{tpu_custom_call.1} parent=1 // pred_fallthru
      _
    // Predicated region
    $region22: #{tpu_custom_call.1} parent=1 // pred_check
      _
    $region23: #{tpu_custom_call.1} parent=1 // pred_check_branch
      %54 = sbr.rel (0) target = $region25
    $region24: #{tpu_custom_call.1} parent=1 // pred_region
      %55 = dma.done [#allocation3], 256
    $region25: #{tpu_custom_call.1} parent=1 // pred_fallthru
      _
    // Predicated region
    $region26: #{tpu_custom_call.1} parent=1 // pred_check
      _
    $region27: #{tpu_custom_call.1} parent=1 // pred_check_branch
      %57 = sbr.rel (0) target = $region29
    $region28: #{tpu_custom_call.1} parent=1 // pred_region
      %58 = dma.done [#allocation6], 512
    $region29: #{tpu_custom_call.1} parent=1 // pred_fallthru
      _
    // Predicated region
    $region30: #{tpu_custom_call.1} parent=1 // pred_check
      _
    $region31: #{tpu_custom_call.1} parent=1 // pred_check_branch
      %60 = sbr.rel (0) target = $region33
    $region32: #{tpu_custom_call.1} parent=1 // pred_region
      %61 = dma.done [#allocation6], 1024
    $region33: #{tpu_custom_call.1} parent=1 // pred_fallthru
      _
    %v62 = vld [vmem:[#allocation5] sm:$0xff]
    %v63 = vld [vmem:[#allocation5 + $0x8] sm:$0xff]
    %v64 = vld [vmem:[#allocation5 + $0x10] sm:$0xff]
    %v65 = vld [vmem:[#allocation5 + $0x18] sm:$0xff]
    %v66 = vld [vmem:[#allocation7] sm:$0xff]
    %v67 = vld [vmem:[#allocation7 + $0x8] sm:$0xff]
    %v68 = vld [vmem:[#allocation7 + $0x10] sm:$0xff]
    %v69 = vld [vmem:[#allocation7 + $0x18] sm:$0xff]
    %v70 = vld [vmem:[#allocation7 + $0x20] sm:$0xff]
    %v71 = vld [vmem:[#allocation7 + $0x28] sm:$0xff]
    %v72 = vld [vmem:[#allocation7 + $0x30] sm:$0xff]
    %v73 = vld [vmem:[#allocation7 + $0x38] sm:$0xff]
    %v74 = vld [vmem:[%s2] sm:$0x1]
    %v75 = vld [vmem:[%s4] sm:$0x1]
    %v76 = vld [vmem:[#allocation2] sm:$0xff]
    %v77 = vld [vmem:[#allocation2 + $0x8] sm:$0xff]
    %v79 = vlaneseq
    %v80 = vshrl.u32 %v79, 7
    %v81 = vsub.s32 0, %v80
    %v82 = vrot.slane %v74, %v81
    %vm84 = vcmask 261120
    %v86 = vsel %vm84, %v76, 0
    %v89 = vsel %vm84, %v77, 0
    %91 = vmatprep.subr.mxu0 0.0
    %92 = vmatpush1.msra.mxu0 %v62
    %93 = vmatprep.subr.mxu0 0.0
    %94 = vmatpush1.msra.mxu0 %v63
    %95 = vmatprep.subr.mxu0 0.0
    %96 = vmatpush1.msra.mxu0 %v64
    %97 = vmatprep.subr.mxu0 0.0
    %98 = vmatpush1.msra.mxu0 %v65
    %99 = vmatprep.subr.mxu0 0.0
    %100 = vmatpush1.msra.mxu0 0.0
    %101 = vmatprep.subr.mxu0 0.0
    %102 = vmatpush1.msra.mxu0 0.0
    %103 = vmatprep.subr.mxu0 0.0
    %104 = vmatpush1.msra.mxu0 0.0
    %105 = vmatprep.subr.mxu0 0.0
    %106 = vmatpush1.msra.mxu0 0.0
    %107 = vmatprep.subr.mxu0 0.0
    %108 = vmatpush1.msra.mxu0 0.0
    %109 = vmatprep.subr.mxu0 0.0
    %110 = vmatpush1.msra.mxu0 0.0
    %111 = vmatprep.subr.mxu0 0.0
    %112 = vmatpush1.msra.mxu0 0.0
    %113 = vmatprep.subr.mxu0 0.0
    %114 = vmatpush1.msra.mxu0 0.0
    %115 = vmatprep.subr.mxu0 0.0
    %116 = vmatpush1.msra.mxu0 0.0
    %117 = vmatprep.subr.mxu0 0.0
    %118 = vmatpush1.msra.mxu0 0.0
    %119 = vmatprep.subr.mxu0 0.0
    %120 = vmatpush1.msra.mxu0 0.0
    %121 = vmatprep.subr.mxu0 0.0
    %122 = vmatpush1.msra.mxu0 0.0
    %123 = vmatprep.subr.mxu0 0.0
    %124 = vmatpush1.msra.mxu0 0.0
    %125 = vmatprep.subr.mxu0 0.0
    %126 = vmatpush1.msra.mxu0 0.0
    %127 = vmatprep.subr.mxu0 0.0
    %128 = vmatpush1.msra.mxu0 0.0
    %129 = vmatprep.subr.mxu0 0.0
    %130 = vmatpush1.msra.mxu0 0.0
    %131 = vmatprep.subr.mxu0 0.0
    %132 = vmatpush1.msra.mxu0 0.0
    %133 = vmatprep.subr.mxu0 0.0
    %134 = vmatpush1.msra.mxu0 0.0
    %135 = vmatprep.subr.mxu0 0.0
    %136 = vmatpush1.msra.mxu0 0.0
    %137 = vmatprep.subr.mxu0 0.0
    %138 = vmatpush1.msra.mxu0 0.0
    %139 = vmatprep.subr.mxu0 0.0
    %140 = vmatpush1.msra.mxu0 0.0
    %141 = vmatprep.subr.mxu0 0.0
    %142 = vmatpush1.msra.mxu0 0.0
    %143 = vmatprep.subr.mxu0 0.0
    %144 = vmatpush1.msra.mxu0 0.0
    %145 = vmatprep.subr.mxu0 0.0
    %146 = vmatpush1.msra.mxu0 0.0
    %147 = vmatprep.subr.mxu0 0.0
    %148 = vmatpush1.msra.mxu0 0.0
    %149 = vmatprep.subr.mxu0 0.0
    %150 = vmatpush1.msra.mxu0 0.0
    %151 = vmatprep.subr.mxu0 0.0
    %152 = vmatpush1.msra.mxu0 0.0
    %153 = vmatprep.subr.mxu0 0.0
    %154 = vmatpush1.msra.mxu0 0.0
    %155 = vmatprep.mubr.f32.mxu0 0.0
    %156 = vmatmul.mubr.f32.gmra.mrb[0].mxu0 %v86
    %v157 = vpop.f32.mrb[0].mxu0
    %v158 = vadd.f32 %v82, %v157
    %v159 = vpop.f32.mrb[0].mxu0
    %160 = vmatprep.mubr.f32.mxu0 0.0
    %161 = vmatmul.mubr.f32.gmra.mrb[0].mxu0 %v89
    %v162 = vpop.f32.mrb[0].mxu0
    %v163 = vadd.f32 %v82, %v162
    %v164 = vpop.f32.mrb[0].mxu0
    %165 = vdwg.mxu0
    %v166 = vmul.f32 %v158, 0.5
    %v167 = vmul.f32 %v163, 0.5
    %v168 = vmul.f32 %v158, 0.70710677
    %v169 = vmul.f32 %v163, 0.70710677
    %v170 = verf.f32.pop %v168
    %v171 = verf.f32.pop %v169
    %v172 = vadd.f32 %v170, 1.0
    %v173 = vadd.f32 %v171, 1.0
    %v174 = vmul.f32 %v166, %v172
    %v175 = vmul.f32 %v167, %v173
    %v177 = vlaneseq
    %v178 = vshrl.u32 %v177, 7
    %v179 = vsub.s32 0, %v178
    %v180 = vrot.slane %v75, %v179
    %vm182 = vcmask 523264
    %v184 = vsel %vm182, %v174, 0
    %v187 = vsel %vm182, %v175, 0
    %189 = vmatprep.subr.mxu0 0.0
    %190 = vmatpush1.msra.mxu0 %v66
    %191 = vmatprep.subr.mxu0 0.0
    %192 = vmatpush1.msra.mxu0 %v67
    %193 = vmatprep.subr.mxu0 0.0
    %194 = vmatpush1.msra.mxu0 %v68
    %195 = vmatprep.subr.mxu0 0.0
    %196 = vmatpush1.msra.mxu0 %v69
    %197 = vmatprep.subr.mxu0 0.0
    %198 = vmatpush1.msra.mxu0 %v70
    %199 = vmatprep.subr.mxu0 0.0
    %200 = vmatpush1.msra.mxu0 %v71
    %201 = vmatprep.subr.mxu0 0.0
    %202 = vmatpush1.msra.mxu0 %v72
    %203 = vmatprep.subr.mxu0 0.0
    %204 = vmatpush1.msra.mxu0 %v73
    %205 = vmatprep.subr.mxu0 0.0
    %206 = vmatpush1.msra.mxu0 0.0
    %207 = vmatprep.subr.mxu0 0.0
    %208 = vmatpush1.msra.mxu0 0.0
    %209 = vmatprep.subr.mxu0 0.0
    %210 = vmatpush1.msra.mxu0 0.0
    %211 = vmatprep.subr.mxu0 0.0
    %212 = vmatpush1.msra.mxu0 0.0
    %213 = vmatprep.subr.mxu0 0.0
    %214 = vmatpush1.msra.mxu0 0.0
    %215 = vmatprep.subr.mxu0 0.0
    %216 = vmatpush1.msra.mxu0 0.0
    %217 = vmatprep.subr.mxu0 0.0
    %218 = vmatpush1.msra.mxu0 0.0
    %219 = vmatprep.subr.mxu0 0.0
    %220 = vmatpush1.msra.mxu0 0.0
    %221 = vmatprep.subr.mxu0 0.0
    %222 = vmatpush1.msra.mxu0 0.0
    %223 = vmatprep.subr.mxu0 0.0
    %224 = vmatpush1.msra.mxu0 0.0
    %225 = vmatprep.subr.mxu0 0.0
    %226 = vmatpush1.msra.mxu0 0.0
    %227 = vmatprep.subr.mxu0 0.0
    %228 = vmatpush1.msra.mxu0 0.0
    %229 = vmatprep.subr.mxu0 0.0
    %230 = vmatpush1.msra.mxu0 0.0
    %231 = vmatprep.subr.mxu0 0.0
    %232 = vmatpush1.msra.mxu0 0.0
    %233 = vmatprep.subr.mxu0 0.0
    %234 = vmatpush1.msra.mxu0 0.0
    %235 = vmatprep.subr.mxu0 0.0
    %236 = vmatpush1.msra.mxu0 0.0
    %237 = vmatprep.subr.mxu0 0.0
    %238 = vmatpush1.msra.mxu0 0.0
    %239 = vmatprep.subr.mxu0 0.0
    %240 = vmatpush1.msra.mxu0 0.0
    %241 = vmatprep.subr.mxu0 0.0
    %242 = vmatpush1.msra.mxu0 0.0
    %243 = vmatprep.subr.mxu0 0.0
    %244 = vmatpush1.msra.mxu0 0.0
    %245 = vmatprep.subr.mxu0 0.0
    %246 = vmatpush1.msra.mxu0 0.0
    %247 = vmatprep.subr.mxu0 0.0
    %248 = vmatpush1.msra.mxu0 0.0
    %249 = vmatprep.subr.mxu0 0.0
    %250 = vmatpush1.msra.mxu0 0.0
    %251 = vmatprep.subr.mxu0 0.0
    %252 = vmatpush1.msra.mxu0 0.0
    %253 = vmatprep.mubr.f32.mxu0 0.0
    %254 = vmatmul.mubr.f32.gmra.mrb[0].mxu0 %v184
    %v255 = vpop.f32.mrb[0].mxu0
    %v256 = vadd.f32 %v180, %v255
    %v257 = vpop.f32.mrb[0].mxu0
    %258 = vmatprep.mubr.f32.mxu0 0.0
    %259 = vmatmul.mubr.f32.gmra.mrb[0].mxu0 %v187
    %v260 = vpop.f32.mrb[0].mxu0
    %v261 = vadd.f32 %v180, %v260
    %v262 = vpop.f32.mrb[0].mxu0
    %263 = vdwg.mxu0
    %264 = vst [vmem:[#allocation8] sm:$0xff] %v256
    %265 = vst [vmem:[#allocation8 + $0x8] sm:$0xff] %v261
    // Predicated region
    $region34: #{tpu_custom_call.1} parent=1 // pred_check
      _
    $region35: #{tpu_custom_call.1} parent=1 // pred_check_branch
      %267 = sbr.rel (0) target = $region37
    $region36: #{tpu_custom_call.1} parent=1 // pred_region
      %s269 = ssub.s32 256, 256
      %270 = vsyncadd [#allocation4], %s269
      %s271 = sshll.u32 [#allocation8], 4
      %s272 = int_to_ptr.vmem [resolvable:$true] %s271
      %277 = dma.vmem_to_hbm [thread:$0]  %s272, 256, %s5, [#allocation4], 128, 128, 8
    $region37: #{tpu_custom_call.1} parent=1 // pred_fallthru
      _
    // Predicated region
    $region38: #{tpu_custom_call.1} parent=1 // pred_check
      _
    $region39: #{tpu_custom_call.1} parent=1 // pred_check_branch
      %279 = sbr.rel (0) target = $region41
    $region40: #{tpu_custom_call.1} parent=1 // pred_region
      %280 = dma.done [#allocation4], 256
    $region41: #{tpu_custom_call.1} parent=1 // pred_fallthru
      _
    %281 = vsyncpa [#allocation3], 1
    %282 = vsyncpa [#allocation6], 1
    %283 = vsyncpa [#allocation4], 1

</llo_original>
